<compile_context>
chip_gen: v5e
topology: v5e:2x2
jax: 0.10.0
libtpu: 0.0.40
codegen_flags: <defaults>
</compile_context>

<pallas_src>
import jax
import jax.numpy as jnp
from jax.experimental import pallas as pl
from jax.experimental.pallas import tpu as pltpu

LANE = 128       # TPU lane width (last axis)
SUBLANE = 8      # TPU sublane width (second-to-last axis, f32)
NEG_BIG = -1e30  # large-negative (not -inf) so exp underflows to 0 without NaNs


def _round_up(n, m):
    return ((n + m - 1) // m) * m


def _mlp_softmax_kernel(x_ref, w1_ref, w2_ref, w3_ref, out_ref):
    """relu(x@W1) -> relu(.@W2) -> softmax(.@W3); biases pre-folded into the W*."""
    # bf16 operands feed the MXU natively (f32xf32 matmuls are emulated with extra
    # passes); accumulation stays f32 via preferred_element_type.
    x = x_ref[...].astype(jnp.bfloat16)
    h1 = jnp.maximum(
        jnp.dot(x, w1_ref[...], preferred_element_type=jnp.float32), 0.0)
    h2 = jnp.maximum(
        jnp.dot(h1.astype(jnp.bfloat16), w2_ref[...],
                preferred_element_type=jnp.float32), 0.0)
    logits = jnp.dot(h2.astype(jnp.bfloat16), w3_ref[...],
                     preferred_element_type=jnp.float32)

    # Numerically-stable softmax over the (padded, lane-dense) feature axis in f32.
    # Padded logit columns are ~-1e30 so they contribute ~0 to max/sum.
    m = jnp.max(logits, axis=1, keepdims=True)
    e = jnp.exp(logits - m)
    denom = jnp.sum(e, axis=1, keepdims=True)
    inv = pl.reciprocal(denom, approx=True)   # EUP vrcp (otherwise-idle slot)
    inv = inv * (2.0 - denom * inv)           # one Newton step -> ~f32 exact
    out_ref[...] = (e * inv).astype(out_ref.dtype)


def pack_params(params, dtype=jnp.bfloat16):
    """Fold biases into the weights via a ones-carrier row; pad to lane width.

    Call ONCE when parameters are created/updated (not per forward call): the
    scatter/pad ops here are wrapper-side XLA ops that would otherwise dominate
    small-batch wall clock.
    """
    w1 = jnp.asarray(params["w1"], jnp.float32)
    b1 = jnp.reshape(jnp.asarray(params["b1"], jnp.float32), (-1,))
    w2 = jnp.asarray(params["w2"], jnp.float32)
    b2 = jnp.reshape(jnp.asarray(params["b2"], jnp.float32), (-1,))
    w3 = jnp.asarray(params["w3"], jnp.float32)
    b3 = jnp.reshape(jnp.asarray(params["b3"], jnp.float32), (-1,))

    input_dim, hidden_dim = w1.shape
    output_dim = w3.shape[1]
    k1 = input_dim + 1  # + ones-carrier column
    assert k1 <= LANE and hidden_dim + 1 <= LANE and output_dim < LANE

    # Layer 1: (k1, 128).  Small K stays small — no 128-lane inflation of x.
    w1p = jnp.zeros((k1, LANE), jnp.float32)
    w1p = w1p.at[:input_dim, :hidden_dim].set(w1)
    w1p = w1p.at[input_dim, :hidden_dim].set(b1)      # bias row (hit by x's 1.0)
    w1p = w1p.at[input_dim, hidden_dim].set(1.0)      # carrier -> h1[:, hidden_dim]

    # Layer 2: (128, 128).
    w2p = jnp.zeros((LANE, LANE), jnp.float32)
    w2p = w2p.at[:hidden_dim, :hidden_dim].set(w2)
    w2p = w2p.at[hidden_dim, :hidden_dim].set(b2)
    w2p = w2p.at[hidden_dim, hidden_dim].set(1.0)     # carrier -> h2[:, hidden_dim]

    # Layer 3: (128, 128); padded logit columns get -1e30 (killed by softmax).
    w3p = jnp.zeros((LANE, LANE), jnp.float32)
    w3p = w3p.at[:hidden_dim, :output_dim].set(w3)
    w3p = w3p.at[hidden_dim, :output_dim].set(b3)
    w3p = w3p.at[hidden_dim, output_dim:].set(NEG_BIG)

    packed = (w1p.astype(dtype), w2p.astype(dtype), w3p.astype(dtype))
    return packed, (input_dim, output_dim)


def weight_generator_forward(x, packed_weights, *, output_dim, block_rows=None):
    """x: [B, input_dim] float32. Returns softmax probs [B, output_dim] (f32)."""
    w1p, w2p, w3p = packed_weights
    k1 = w1p.shape[0]            # input_dim + 1 (ones carrier)
    B = x.shape[0]
    assert x.shape[1] == k1 - 1

    # Append the ones-carrier column (folds biases into the matmuls).  x is NOT
    # padded to 128 lanes: the kernel reads the narrow (B, k1) slab directly.
    x_aug = jnp.concatenate(
        [x.astype(jnp.float32), jnp.ones((B, 1), jnp.float32)], axis=1)

    if block_rows is None:
        # Large row tiles amortize per-step overhead and keep the MXU streaming;
        # cap at 512 so large batches still give >=2 "parallel" grid steps for the
        # two TensorCores on v7x and VMEM stays tiny (no vmem_limit needed, even
        # on v5e's 16 MiB scoped default).  Multiple of 16 for bf16 packing.
        block_rows = min(_round_up(B, 16), 512)
    b_pad = _round_up(B, block_rows)
    if b_pad != B:
        x_aug = jnp.pad(x_aug, ((0, b_pad - B), (0, 0)))
    grid = (b_pad // block_rows,)

    cost = pl.CostEstimate(
        flops=2 * b_pad * LANE * (k1 + 2 * LANE),
        transcendentals=b_pad * (LANE + 1),
        bytes_accessed=(4 * b_pad * (k1 + LANE)        # f32 x in + probs out
                        + 2 * LANE * (k1 + 2 * LANE)),  # bf16 weights
    )

    out_pad = pl.pallas_call(
        _mlp_softmax_kernel,
        out_shape=jax.ShapeDtypeStruct((b_pad, LANE), jnp.float32),
        grid=grid,
        in_specs=[
            pl.BlockSpec((block_rows, k1), lambda i: (i, 0)),  # activations
            pl.BlockSpec((k1, LANE), lambda i: (0, 0)),        # W1 (VMEM-resident)
            pl.BlockSpec((LANE, LANE), lambda i: (0, 0)),      # W2 (VMEM-resident)
            pl.BlockSpec((LANE, LANE), lambda i: (0, 0)),      # W3 (VMEM-resident)
        ],
        out_specs=pl.BlockSpec((block_rows, LANE), lambda i: (i, 0)),
        compiler_params=pltpu.CompilerParams(
            dimension_semantics=("parallel",)),
        cost_estimate=cost,
    )(x_aug, w1p, w2p, w3p)

    return out_pad[:B, :output_dim]


def init_params(key, input_dim=7, output_dim=11, hidden_dim=32):
    """PyTorch nn.Linear-style init (uniform +/- 1/sqrt(fan_in)); W stored [in, out]."""
    ks = jax.random.split(key, 6)

    def linear(kw, kb, fan_in, fan_out):
        bound = 1.0 / jnp.sqrt(jnp.float32(fan_in))
        w = jax.random.uniform(kw, (fan_in, fan_out), jnp.float32, -bound, bound)
        b = jax.random.uniform(kb, (1, fan_out), jnp.float32, -bound, bound)
        return w, b

    w1, b1 = linear(ks[0], ks[1], input_dim, hidden_dim)
    w2, b2 = linear(ks[2], ks[3], hidden_dim, hidden_dim)
    w3, b3 = linear(ks[4], ks[5], hidden_dim, output_dim)
    return {"w1": w1, "b1": b1, "w2": w2, "b2": b2, "w3": w3, "b3": b3}


if __name__ == "__main__":
    key = jax.random.PRNGKey(0)
    k_x, k_p = jax.random.split(key)

    B, INPUT_DIM, OUTPUT_DIM, HIDDEN_DIM = 8, 7, 11, 32
    x = jax.random.normal(k_x, (B, INPUT_DIM), dtype=jnp.float32)
    params = init_params(k_p, INPUT_DIM, OUTPUT_DIM, HIDDEN_DIM)

    # Pack (bias-fold + pad + bf16 cast) ONCE, outside the per-call path.
    packed, (_, out_dim) = pack_params(params)

    fwd = jax.jit(weight_generator_forward,
                  static_argnames=("output_dim", "block_rows"))
    out = jax.block_until_ready(fwd(x, packed, output_dim=out_dim))

    # Reference in plain JAX / f32 (same math as the PyTorch module).
    h1 = jnp.maximum(x @ params["w1"] + params["b1"], 0.0)
    h2 = jnp.maximum(h1 @ params["w2"] + params["b2"], 0.0)
    ref = jax.nn.softmax(h2 @ params["w3"] + params["b3"], axis=1)

    assert out.shape == (B, OUTPUT_DIM)
    # bf16 weights/activations (f32 accumulation) => slightly looser tolerance.
    assert jnp.allclose(out, ref, atol=5e-3, rtol=5e-3), \
        float(jnp.max(jnp.abs(out - ref)))
    assert jnp.allclose(jnp.sum(out, axis=1), 1.0, atol=1e-4)

    print("KERNEL_OK")
</pallas_src>

<mosaic_0001>
module attributes {stable_mosaic.version = 11 : i64} {
  func.func @_mlp_softmax_kernel(%arg0: i32, %arg1: memref<16x8xf32, #tpu.memory_space<vmem>>, %arg2: memref<8x128xbf16, #tpu.memory_space<vmem>>, %arg3: memref<128x128xbf16, #tpu.memory_space<vmem>>, %arg4: memref<128x128xbf16, #tpu.memory_space<vmem>>, %arg5: memref<16x128xf32, #tpu.memory_space<vmem>>) attributes {dimension_semantics = [#tpu.dimension_semantics<parallel>], iteration_bounds = array<i64: 1>, scalar_prefetch = 0 : i64, scratch_operands = 0 : i64, tpu.core_type = #tpu.core_type<tc>, window_params = [{transform_indices = @transform_0, window_bounds = array<i64: 16, 8>}, {pipeline_mode = #tpu.pipeline_mode<synchronous>, transform_indices = @transform_1, window_bounds = array<i64: 8, 128>}, {pipeline_mode = #tpu.pipeline_mode<synchronous>, transform_indices = @transform_2, window_bounds = array<i64: 128, 128>}, {pipeline_mode = #tpu.pipeline_mode<synchronous>, transform_indices = @transform_3, window_bounds = array<i64: 128, 128>}, {transform_indices = @transform_4, window_bounds = array<i64: 16, 128>}]} {
    %c0 = arith.constant 0 : index
    %c0_0 = arith.constant 0 : index
    %0 = vector.load %arg1[%c0, %c0_0] : memref<16x8xf32, #tpu.memory_space<vmem>>, vector<16x8xf32>
    %1 = arith.truncf %0 : vector<16x8xf32> to vector<16x8xbf16>
    %c0_1 = arith.constant 0 : index
    %c0_2 = arith.constant 0 : index
    %2 = vector.load %arg2[%c0_1, %c0_2] : memref<8x128xbf16, #tpu.memory_space<vmem>>, vector<8x128xbf16>
    %cst = arith.constant dense<0.000000e+00> : vector<16x128xf32>
    %3 = tpu.matmul %1, %2, %cst {dimension_numbers = #tpu.dot_dimension_numbers<[1], [0], [0], [1], [0, 0, 1, 1], [], []>} : vector<16x8xbf16>, vector<8x128xbf16>, vector<16x128xf32> -> vector<16x128xf32>
    %cst_3 = arith.constant 0.000000e+00 : f32
    %4 = vector.broadcast %cst_3 : f32 to vector<16x128xf32>
    %5 = arith.maximumf %3, %4 : vector<16x128xf32>
    %6 = arith.truncf %5 : vector<16x128xf32> to vector<16x128xbf16>
    %c0_4 = arith.constant 0 : index
    %c0_5 = arith.constant 0 : index
    %7 = vector.load %arg3[%c0_4, %c0_5] : memref<128x128xbf16, #tpu.memory_space<vmem>>, vector<128x128xbf16>
    %cst_6 = arith.constant dense<0.000000e+00> : vector<16x128xf32>
    %8 = tpu.matmul %6, %7, %cst_6 {dimension_numbers = #tpu.dot_dimension_numbers<[1], [0], [0], [1], [0, 0, 1, 1], [], []>} : vector<16x128xbf16>, vector<128x128xbf16>, vector<16x128xf32> -> vector<16x128xf32>
    %cst_7 = arith.constant 0.000000e+00 : f32
    %9 = vector.broadcast %cst_7 : f32 to vector<16x128xf32>
    %10 = arith.maximumf %8, %9 : vector<16x128xf32>
    %11 = arith.truncf %10 : vector<16x128xf32> to vector<16x128xbf16>
    %c0_8 = arith.constant 0 : index
    %c0_9 = arith.constant 0 : index
    %12 = vector.load %arg4[%c0_8, %c0_9] : memref<128x128xbf16, #tpu.memory_space<vmem>>, vector<128x128xbf16>
    %cst_10 = arith.constant dense<0.000000e+00> : vector<16x128xf32>
    %13 = tpu.matmul %11, %12, %cst_10 {dimension_numbers = #tpu.dot_dimension_numbers<[1], [0], [0], [1], [0, 0, 1, 1], [], []>} : vector<16x128xbf16>, vector<128x128xbf16>, vector<16x128xf32> -> vector<16x128xf32>
    %cst_11 = arith.constant dense<0xFF800000> : vector<16xf32>
    %14 = vector.multi_reduction <maximumf>, %13, %cst_11 [1] : vector<16x128xf32> to vector<16xf32>
    %15 = vector.shape_cast %14 : vector<16xf32> to vector<16x1xf32>
    %16 = vector.broadcast %15 : vector<16x1xf32> to vector<16x128xf32>
    %17 = arith.subf %13, %16 : vector<16x128xf32>
    %18 = math.exp %17 : vector<16x128xf32>
    %cst_12 = arith.constant dense<0.000000e+00> : vector<16xf32>
    %19 = vector.multi_reduction <add>, %18, %cst_12 [1] : vector<16x128xf32> to vector<16xf32>
    %20 = vector.shape_cast %19 : vector<16xf32> to vector<16x1xf32>
    %21 = tpu.reciprocal %20 {approx = true} : vector<16x1xf32> -> vector<16x1xf32>
    %22 = arith.mulf %20, %21 : vector<16x1xf32>
    %cst_13 = arith.constant 2.000000e+00 : f32
    %23 = vector.broadcast %cst_13 : f32 to vector<16x1xf32>
    %24 = arith.subf %23, %22 : vector<16x1xf32>
    %25 = arith.mulf %21, %24 : vector<16x1xf32>
    %26 = vector.broadcast %25 : vector<16x1xf32> to vector<16x128xf32>
    %27 = arith.mulf %18, %26 : vector<16x128xf32>
    %c0_14 = arith.constant 0 : index
    %c0_15 = arith.constant 0 : index
    %28 = vector.load %arg5[%c0_14, %c0_15] : memref<16x128xf32, #tpu.memory_space<vmem>>, vector<16x128xf32>
    tpu.vector_store %arg5[%c0_14, %c0_15], %27 {strides = array<i32>} : memref<16x128xf32, #tpu.memory_space<vmem>>, vector<16x128xf32>,
    return
  }
  func.func @transform_0(%arg0: i32) -> (i32, i32) {
    %c0_i32 = arith.constant 0 : i32
    %c0_i32_0 = arith.constant 0 : i32
    return %arg0, %c0_i32 : i32, i32
  }
  func.func @transform_1(%arg0: i32) -> (i32, i32) {
    %c0_i32 = arith.constant 0 : i32
    %c0_i32_0 = arith.constant 0 : i32
    %c0_i32_1 = arith.constant 0 : i32
    return %c0_i32, %c0_i32_0 : i32, i32
  }
  func.func @transform_2(%arg0: i32) -> (i32, i32) {
    %c0_i32 = arith.constant 0 : i32
    %c0_i32_0 = arith.constant 0 : i32
    %c0_i32_1 = arith.constant 0 : i32
    return %c0_i32, %c0_i32_0 : i32, i32
  }
  func.func @transform_3(%arg0: i32) -> (i32, i32) {
    %c0_i32 = arith.constant 0 : i32
    %c0_i32_0 = arith.constant 0 : i32
    %c0_i32_1 = arith.constant 0 : i32
    return %c0_i32, %c0_i32_0 : i32, i32
  }
  func.func @transform_4(%arg0: i32) -> (i32, i32) {
    %c0_i32 = arith.constant 0 : i32
    %c0_i32_0 = arith.constant 0 : i32
    return %arg0, %c0_i32 : i32, i32
  }
}

</mosaic_0001>

<llo_original>
// kernel: weight_generator_forward.1
$region0: #{weight_generator_forward.1}
  #allocation0 [shape = 'u32[]', space=smem, size = 0x4, offset = 0x4, fixed_abs, tag = 'smem constant byte address 0x4 - core index']
  #allocation1 [shape = 'u32[72,128]{1,0:T(1,128)}', space=vmem, size = 0x9000, scoped, tag = 'internal scratch']
  %s0 = inlined_call_operand.vmem [shape: f32[16,8], index: 0, kind: input, shape index: {}]
  %s1 = inlined_call_operand.vmem [shape: bf16[8,128], index: 1, kind: input, shape index: {}]
  %s2 = inlined_call_operand.hbm [shape: bf16[128,128], index: 2, kind: input, shape index: {}]
  %s3 = inlined_call_operand.hbm [shape: bf16[128,128], index: 3, kind: input, shape index: {}]
  %s4 = inlined_call_operand.vmem [shape: f32[16,128], index: 4, kind: output, shape index: {}]
  %s5 = sld [smem:[#allocation0]]
  $region34: #{weight_generator_forward.1} parent=0
    _
  %s7 = ssub.s32 1, %s5
  %s8 = scalar_select 0, %s7, %s5
  $region1: #{weight_generator_forward.1} parent=0
    #allocation2 [shape = 'u8[32768]{0}', space=vmem, size = 0x8000, scoped, tag = 'input window, operand 2, single buffered']
    #allocation3 [shape = 's32[1]{0}', space=sflag, size = 0x4, scoped, tag = 'scoped memory for weight_generator_forward.1']
    #allocation4 [shape = 'u8[32768]{0}', space=vmem, size = 0x8000, scoped, tag = 'input window, operand 3, single buffered']
    #allocation5 [shape = 's32[1]{0}', space=sflag, size = 0x4, scoped, tag = 'scoped memory for weight_generator_forward.1']
    %9 = vsyncpa [#allocation3], 0
    %10 = vsyncpa [#allocation5], 0
    // Predicated region
    $region2: #{weight_generator_forward.1} parent=1 // pred_check
      _
    $region3: #{weight_generator_forward.1} parent=1 // pred_check_branch
      %12 = sbr.rel (0) target = $region5
    $region4: #{weight_generator_forward.1} parent=1 // pred_region
      _
    $region5: #{weight_generator_forward.1} parent=1 // pred_fallthru
      _
    // Predicated region
    $region6: #{weight_generator_forward.1} parent=1 // pred_check
      _
    $region7: #{weight_generator_forward.1} parent=1 // pred_check_branch
      %14 = sbr.rel (0) target = $region9
    $region8: #{weight_generator_forward.1} parent=1 // pred_region
      _
    $region9: #{weight_generator_forward.1} parent=1 // pred_fallthru
      _
    // Predicated region
    $region10: #{weight_generator_forward.1} parent=1 // pred_check
      _
    $region11: #{weight_generator_forward.1} parent=1 // pred_check_branch
      %16 = sbr.rel (0) target = $region13
    $region12: #{weight_generator_forward.1} parent=1 // pred_region
      %18 = vsyncadd [#allocation3], 0
      %s19 = sshll.u32 %s2, 4
      %s20 = int_to_ptr.hbm [resolvable:$true] %s19
      %s21 = sshll.u32 [#allocation2], 4
      %s22 = int_to_ptr.vmem [resolvable:$true] %s21
      %27 = dma.hbm_to_vmem [thread:$0]  %s20, 1024, %s22, [#allocation3], 64, 64, 4
    $region13: #{weight_generator_forward.1} parent=1 // pred_fallthru
      _
    // Predicated region
    $region14: #{weight_generator_forward.1} parent=1 // pred_check
      _
    $region15: #{weight_generator_forward.1} parent=1 // pred_check_branch
      %29 = sbr.rel (0) target = $region17
    $region16: #{weight_generator_forward.1} parent=1 // pred_region
      %31 = vsyncadd [#allocation5], 0
      %s32 = sshll.u32 %s3, 4
      %s33 = int_to_ptr.hbm [resolvable:$true] %s32
      %s34 = sshll.u32 [#allocation4], 4
      %s35 = int_to_ptr.vmem [resolvable:$true] %s34
      %40 = dma.hbm_to_vmem [thread:$0]  %s33, 1024, %s35, [#allocation5], 64, 64, 4
    $region17: #{weight_generator_forward.1} parent=1 // pred_fallthru
      _
    // Predicated region
    $region18: #{weight_generator_forward.1} parent=1 // pred_check
      _
    $region19: #{weight_generator_forward.1} parent=1 // pred_check_branch
      %42 = sbr.rel (0) target = $region21
    $region20: #{weight_generator_forward.1} parent=1 // pred_region
      %44 = dma.done [#allocation3], 1024
    $region21: #{weight_generator_forward.1} parent=1 // pred_fallthru
      _
    // Predicated region
    $region22: #{weight_generator_forward.1} parent=1 // pred_check
      _
    $region23: #{weight_generator_forward.1} parent=1 // pred_check_branch
      %46 = sbr.rel (0) target = $region25
    $region24: #{weight_generator_forward.1} parent=1 // pred_region
      %48 = dma.done [#allocation5], 1024
    $region25: #{weight_generator_forward.1} parent=1 // pred_fallthru
      _
    %v50 = vld [vmem:[%s0] sm:$0xff]
    %v51 = vld [vmem:[%s0 + $0x8] sm:$0xff]
    %v52 = vpack.c.bf16 %v51, %v50
    %v53 = vld [vmem:[%s1] sm:$0xf]
    %vm54 = vcmask 64512
    %v56 = vsel %vm54, %v52, 0
    %vm58 = vcmask 1043456
    %v60 = vsel %vm58, %v53, 0
    %62 = vmatpush.bf16.msra.mxu0 0
    %63 = vmatpush.bf16.msra.mxu0 0
    %64 = vmatpush.bf16.msra.mxu0 0
    %65 = vmatpush.bf16.msra.mxu0 0
    %66 = vmatpush.bf16.msra.mxu0 0
    %67 = vmatpush.bf16.msra.mxu0 0
    %68 = vmatpush.bf16.msra.mxu0 0
    %69 = vmatpush.bf16.msra.mxu0 %v60
    %70 = vmatmul.bf16.gmra.mxu0 %v56
    %v71 = vpop.f32.mrf.mxu0
    %v72 = vadd.f32 0.0, %v71
    %v73 = vpop.f32.mrf.mxu0
    %v74 = vadd.f32 0.0, %v73
    %75 = vdwg.mxu0
    %v76 = vmax.f32 %v72, 0.0
    %v77 = vmax.f32 %v74, 0.0
    %v78 = vpack.c.bf16 %v77, %v76
    %v79 = vld [vmem:[#allocation2] sm:$0xf]
    %v80 = vld [vmem:[#allocation2 + $0x4] sm:$0xf]
    %v81 = vld [vmem:[#allocation2 + $0x8] sm:$0xf]
    %v82 = vld [vmem:[#allocation2 + $0xc] sm:$0xf]
    %v83 = vld [vmem:[#allocation2 + $0x10] sm:$0xf]
    %v84 = vld [vmem:[#allocation2 + $0x14] sm:$0xf]
    %v85 = vld [vmem:[#allocation2 + $0x18] sm:$0xf]
    %v86 = vld [vmem:[#allocation2 + $0x1c] sm:$0xf]
    %v87 = vld [vmem:[#allocation2 + $0x20] sm:$0xf]
    %v88 = vld [vmem:[#allocation2 + $0x24] sm:$0xf]
    %v89 = vld [vmem:[#allocation2 + $0x28] sm:$0xf]
    %v90 = vld [vmem:[#allocation2 + $0x2c] sm:$0xf]
    %v91 = vld [vmem:[#allocation2 + $0x30] sm:$0xf]
    %v92 = vld [vmem:[#allocation2 + $0x34] sm:$0xf]
    %v93 = vld [vmem:[#allocation2 + $0x38] sm:$0xf]
    %v94 = vld [vmem:[#allocation2 + $0x3c] sm:$0xf]
    %v111 = vunpack.c.l.b16 %v79
    %v112 = vunpack.c.l.b16 %v80
    %v113 = vunpack.c.l.b16 %v81
    %v114 = vunpack.c.l.b16 %v82
    %v115 = vunpack.c.l.b16 %v83
    %v116 = vunpack.c.l.b16 %v84
    %v117 = vunpack.c.l.b16 %v85
    %v118 = vunpack.c.l.b16 %v86
    %v119 = vunpack.c.l.b16 %v87
    %v120 = vunpack.c.l.b16 %v88
    %v121 = vunpack.c.l.b16 %v89
    %v122 = vunpack.c.l.b16 %v90
    %v123 = vunpack.c.l.b16 %v91
    %v124 = vunpack.c.l.b16 %v92
    %v125 = vunpack.c.l.b16 %v93
    %v126 = vunpack.c.l.b16 %v94
    %v127 = vpack.c.b16 %v112, %v111
    %v128 = vpack.c.b16 %v114, %v113
    %v129 = vpack.c.b16 %v116, %v115
    %v130 = vpack.c.b16 %v118, %v117
    %v131 = vpack.c.b16 %v120, %v119
    %v132 = vpack.c.b16 %v122, %v121
    %v133 = vpack.c.b16 %v124, %v123
    %v134 = vpack.c.b16 %v126, %v125
    %143 = vmatpush.bf16.msra.mxu0 %v134
    %144 = vmatpush.bf16.msra.mxu0 %v133
    %145 = vmatpush.bf16.msra.mxu0 %v132
    %146 = vmatpush.bf16.msra.mxu0 %v131
    %147 = vmatpush.bf16.msra.mxu0 %v130
    %148 = vmatpush.bf16.msra.mxu0 %v129
    %149 = vmatpush.bf16.msra.mxu0 %v128
    %150 = vmatpush.bf16.msra.mxu0 %v127
    %151 = vmatmul.bf16.gmra.mxu0 %v78
    %v152 = vpop.f32.mrf.mxu0
    %v153 = vadd.f32 0.0, %v152
    %v154 = vpop.f32.mrf.mxu0
    %v155 = vadd.f32 0.0, %v154
    %156 = vdwg.mxu0
    %v157 = vmax.f32 %v153, 0.0
    %v158 = vmax.f32 %v155, 0.0
    %v159 = vpack.c.bf16 %v158, %v157
    %v160 = vld [vmem:[#allocation4] sm:$0xf]
    %v161 = vld [vmem:[#allocation4 + $0x4] sm:$0xf]
    %v162 = vld [vmem:[#allocation4 + $0x8] sm:$0xf]
    %v163 = vld [vmem:[#allocation4 + $0xc] sm:$0xf]
    %v164 = vld [vmem:[#allocation4 + $0x10] sm:$0xf]
    %v165 = vld [vmem:[#allocation4 + $0x14] sm:$0xf]
    %v166 = vld [vmem:[#allocation4 + $0x18] sm:$0xf]
    %v167 = vld [vmem:[#allocation4 + $0x1c] sm:$0xf]
    %v168 = vld [vmem:[#allocation4 + $0x20] sm:$0xf]
    %v169 = vld [vmem:[#allocation4 + $0x24] sm:$0xf]
    %v170 = vld [vmem:[#allocation4 + $0x28] sm:$0xf]
    %v171 = vld [vmem:[#allocation4 + $0x2c] sm:$0xf]
    %v172 = vld [vmem:[#allocation4 + $0x30] sm:$0xf]
    %v173 = vld [vmem:[#allocation4 + $0x34] sm:$0xf]
    %v174 = vld [vmem:[#allocation4 + $0x38] sm:$0xf]
    %v175 = vld [vmem:[#allocation4 + $0x3c] sm:$0xf]
    %v192 = vunpack.c.l.b16 %v160
    %v193 = vunpack.c.l.b16 %v161
    %v194 = vunpack.c.l.b16 %v162
    %v195 = vunpack.c.l.b16 %v163
    %v196 = vunpack.c.l.b16 %v164
    %v197 = vunpack.c.l.b16 %v165
    %v198 = vunpack.c.l.b16 %v166
    %v199 = vunpack.c.l.b16 %v167
    %v200 = vunpack.c.l.b16 %v168
    %v201 = vunpack.c.l.b16 %v169
    %v202 = vunpack.c.l.b16 %v170
    %v203 = vunpack.c.l.b16 %v171
    %v204 = vunpack.c.l.b16 %v172
    %v205 = vunpack.c.l.b16 %v173
    %v206 = vunpack.c.l.b16 %v174
    %v207 = vunpack.c.l.b16 %v175
    %v208 = vpack.c.b16 %v193, %v192
    %v209 = vpack.c.b16 %v195, %v194
    %v210 = vpack.c.b16 %v197, %v196
    %v211 = vpack.c.b16 %v199, %v198
    %v212 = vpack.c.b16 %v201, %v200
    %v213 = vpack.c.b16 %v203, %v202
    %v214 = vpack.c.b16 %v205, %v204
    %v215 = vpack.c.b16 %v207, %v206
    %224 = vmatpush.bf16.msra.mxu0 %v215
    %225 = vmatpush.bf16.msra.mxu0 %v214
    %226 = vmatpush.bf16.msra.mxu0 %v213
    %227 = vmatpush.bf16.msra.mxu0 %v212
    %228 = vmatpush.bf16.msra.mxu0 %v211
    %229 = vmatpush.bf16.msra.mxu0 %v210
    %230 = vmatpush.bf16.msra.mxu0 %v209
    %231 = vmatpush.bf16.msra.mxu0 %v208
    %232 = vmatmul.bf16.gmra.mxu0 %v159
    %v233 = vpop.f32.mrf.mxu0
    %v234 = vadd.f32 0.0, %v233
    %v235 = vpop.f32.mrf.mxu0
    %v236 = vadd.f32 0.0, %v235
    %237 = vdwg.mxu0
    %238 = vmax.xlane.f32.xlu0 %v234
    %v239 = vpop.xlane.xlu0 %238
    %240 = vmax.xlane.f32.xlu0 %v236
    %v241 = vpop.xlane.xlu0 %240
    %v242 = vsub.f32 %v234, %v239
    %v243 = vsub.f32 %v236, %v241
    %v244 = vmul.f32 %v242, 1.442695
    %v245 = vpow.pop %v244
    %v246 = vmul.f32 %v243, 1.442695
    %v247 = vpow.pop %v246
    %248 = vadd.xlane.f32.xlu0 %v245
    %v249 = vpop.xlane.xlu0 %248
    %250 = vadd.xlane.f32.xlu0 %v247
    %v251 = vpop.xlane.xlu0 %250
    %v252 = vrcp.pop %v249
    %v253 = vrcp.pop %v251
    %v254 = vmul.f32 %v249, %v252
    %v255 = vmul.f32 %v251, %v253
    %v256 = vsub.f32 2.0, %v254
    %v257 = vsub.f32 2.0, %v255
    %v258 = vmul.f32 %v252, %v256
    %v259 = vmul.f32 %v253, %v257
    %v260 = vmul.f32 %v245, %v258
    %v261 = vmul.f32 %v247, %v259
    %262 = vst [vmem:[%s4] sm:$0xff] %v260
    %263 = vst [vmem:[%s4 + $0x8] sm:$0xff] %v261
    // Predicated region
    $region26: #{weight_generator_forward.1} parent=1 // pred_check
      _
    $region27: #{weight_generator_forward.1} parent=1 // pred_check_branch
      %265 = sbr.rel (0) target = $region29
    $region28: #{weight_generator_forward.1} parent=1 // pred_region
      _
    $region29: #{weight_generator_forward.1} parent=1 // pred_fallthru
      _
    // Predicated region
    $region30: #{weight_generator_forward.1} parent=1 // pred_check
      _
    $region31: #{weight_generator_forward.1} parent=1 // pred_check_branch
      %267 = sbr.rel (0) target = $region33
    $region32: #{weight_generator_forward.1} parent=1 // pred_region
      _
    $region33: #{weight_generator_forward.1} parent=1 // pred_fallthru
      _
    %268 = vsyncpa [#allocation3], 1
    %269 = vsyncpa [#allocation5], 1

</llo_original>
